<compile_context>
chip_gen: v6e
topology: v6e:2x2x1
jax: 0.10.0
libtpu: 0.0.40
codegen_flags: <defaults>
</compile_context>

<pallas_src>
import jax
import jax.numpy as jnp
from jax.experimental import pallas as pl
from jax.experimental.pallas import tpu as pltpu


def _rmsnorm_kernel(x_ref, g_ref, o_ref):
    # x_ref: (1, TN, D), g_ref: (1, 1, D), o_ref: (1, TN, D)
    x = x_ref[...].astype(jnp.float32)
    g = g_ref[...].astype(jnp.float32)

    # F.normalize(x, dim=-1) == x / max(||x||_2, 1e-12).
    # rsqrt on clamped sum-of-squares (clamp at 1e-12**2) is equivalent and
    # runs on the EUP slot instead of a full-tile VALU divide.
    sumsq = jnp.sum(x * x, axis=-1, keepdims=True)
    inv = jax.lax.rsqrt(jnp.maximum(sumsq, 1e-24))

    # Fold the sqrt(D) scale into the per-row coefficient (shape (1, TN, 1))
    # so only two full-tile multiplies remain: x * coef, then * g.
    coef = inv * jnp.sqrt(jnp.float32(x_ref.shape[-1]))
    o_ref[...] = (x * coef * g).astype(o_ref.dtype)


def rmsnorm(x, g, *, target_tile_bytes=2 * 1024 * 1024):
    """x: (B, N, D), g: (1, 1, D) -> (B, N, D)"""
    B, N, D = x.shape
    assert g.shape == (1, 1, D)

    # Sublane packing granularity for the row-tiled axis (f32 -> 8, bf16 -> 16).
    itemsize = jnp.dtype(x.dtype).itemsize
    sublane = 8 * max(1, 4 // itemsize)

    # Pick a row tile so the f32 working set per tile is ~target_tile_bytes.
    rows = max(1, target_tile_bytes // (D * 4))
    if rows >= N:
        tn = N                                    # full axis: any N allowed
    else:
        tn = max(sublane, (rows // sublane) * sublane)

    grid = (B, pl.cdiv(N, tn))

    # TODO(synk): for production shapes with D < 128 the last dim only fills
    # part of a lane group; a lane-dense repack (multiple rows per 128-lane
    # group) would recover the masked store bandwidth but needs a strided
    # in-lane reduction, so it is left out here.
    return pl.pallas_call(
        _rmsnorm_kernel,
        out_shape=jax.ShapeDtypeStruct((B, N, D), x.dtype),
        grid_spec=pltpu.PrefetchScalarGridSpec(
            num_scalar_prefetch=0,
            grid=grid,
            in_specs=[
                pl.BlockSpec((1, tn, D), lambda b, n: (b, n, 0)),
                # Constant index_map: the weight vector stays resident / is
                # hoisted out of the grid loop rather than re-streamed.
                pl.BlockSpec((1, 1, D), lambda b, n: (0, 0, 0)),
            ],
            out_specs=pl.BlockSpec((1, tn, D), lambda b, n: (b, n, 0)),
        ),
        compiler_params=pltpu.CompilerParams(
            dimension_semantics=("parallel", "parallel"),
            vmem_limit_bytes=48 * 1024 * 1024,
        ),
    )(x, g)


if __name__ == "__main__":
    key = jax.random.PRNGKey(0)
    B, N, D = 2, 8, 32

    x = jax.random.normal(key, (B, N, D), dtype=jnp.float32)
    # Parameter init exactly as in the module: ones of shape (1, 1, dim)
    g = jnp.ones((1, 1, D), dtype=jnp.float32)

    out = rmsnorm(x, g)
    out = jax.block_until_ready(out)

    # Reference check (plain JAX) for the same semantics.
    norm = jnp.sqrt(jnp.sum(x * x, axis=2, keepdims=True))
    ref = x / jnp.maximum(norm, 1e-12) * g * (D ** 0.5)
    assert jnp.allclose(out, ref, atol=1e-5, rtol=1e-5), "mismatch vs reference"

    # Also exercise the tiled path (N larger than one row tile) for coverage.
    B2, N2, D2 = 2, 4096, 128
    x2 = jax.random.normal(jax.random.PRNGKey(1), (B2, N2, D2), dtype=jnp.float32)
    g2 = jnp.ones((1, 1, D2), dtype=jnp.float32)
    out2 = jax.block_until_ready(rmsnorm(x2, g2, target_tile_bytes=256 * 1024))
    norm2 = jnp.sqrt(jnp.sum(x2 * x2, axis=2, keepdims=True))
    ref2 = x2 / jnp.maximum(norm2, 1e-12) * g2 * (D2 ** 0.5)
    assert jnp.allclose(out2, ref2, atol=1e-4, rtol=1e-4), "mismatch (tiled path)"

    print("KERNEL_OK")
</pallas_src>

<mosaic_0001>
module attributes {stable_mosaic.version = 11 : i64} {
  func.func @_rmsnorm_kernel(%arg0: i32, %arg1: i32, %arg2: memref<1x8x32xf32, #tpu.memory_space<vmem>>, %arg3: memref<1x1x32xf32, #tpu.memory_space<vmem>>, %arg4: memref<1x8x32xf32, #tpu.memory_space<vmem>>) attributes {dimension_semantics = [#tpu.dimension_semantics<parallel>, #tpu.dimension_semantics<parallel>], iteration_bounds = array<i64: 2, 1>, scalar_prefetch = 0 : i64, scratch_operands = 0 : i64, tpu.core_type = #tpu.core_type<tc>, window_params = [{transform_indices = @transform_0, window_bounds = array<i64: 1, 8, 32>}, {pipeline_mode = #tpu.pipeline_mode<synchronous>, transform_indices = @transform_1, window_bounds = array<i64: 1, 1, 32>}, {transform_indices = @transform_2, window_bounds = array<i64: 1, 8, 32>}]} {
    %c0 = arith.constant 0 : index
    %c0_0 = arith.constant 0 : index
    %c0_1 = arith.constant 0 : index
    %0 = vector.load %arg2[%c0, %c0_0, %c0_1] : memref<1x8x32xf32, #tpu.memory_space<vmem>>, vector<1x8x32xf32>
    %c0_2 = arith.constant 0 : index
    %c0_3 = arith.constant 0 : index
    %c0_4 = arith.constant 0 : index
    %1 = vector.load %arg3[%c0_2, %c0_3, %c0_4] : memref<1x1x32xf32, #tpu.memory_space<vmem>>, vector<1x1x32xf32>
    %2 = arith.mulf %0, %0 : vector<1x8x32xf32>
    %cst = arith.constant dense<0.000000e+00> : vector<1x8xf32>
    %3 = vector.multi_reduction <add>, %2, %cst [2] : vector<1x8x32xf32> to vector<1x8xf32>
    %4 = vector.shape_cast %3 : vector<1x8xf32> to vector<1x8x1xf32>
    %cst_5 = arith.constant 1.000000e-24 : f32
    %5 = vector.broadcast %cst_5 : f32 to vector<1x8x1xf32>
    %6 = arith.maximumf %4, %5 : vector<1x8x1xf32>
    %7 = math.rsqrt %6 : vector<1x8x1xf32>
    %cst_6 = arith.constant 3.200000e+01 : f32
    %8 = math.sqrt %cst_6 : f32
    %9 = vector.broadcast %8 : f32 to vector<1x8x1xf32>
    %10 = arith.mulf %7, %9 : vector<1x8x1xf32>
    %11 = vector.broadcast %10 : vector<1x8x1xf32> to vector<1x8x32xf32>
    %12 = arith.mulf %0, %11 : vector<1x8x32xf32>
    %13 = vector.broadcast %1 : vector<1x1x32xf32> to vector<1x8x32xf32>
    %14 = arith.mulf %12, %13 : vector<1x8x32xf32>
    %c0_7 = arith.constant 0 : index
    %c0_8 = arith.constant 0 : index
    %c0_9 = arith.constant 0 : index
    %15 = vector.load %arg4[%c0_7, %c0_8, %c0_9] : memref<1x8x32xf32, #tpu.memory_space<vmem>>, vector<1x8x32xf32>
    tpu.vector_store %arg4[%c0_7, %c0_8, %c0_9], %14 {strides = array<i32>} : memref<1x8x32xf32, #tpu.memory_space<vmem>>, vector<1x8x32xf32>,
    return
  }
  func.func @transform_0(%arg0: i32, %arg1: i32) -> (i32, i32, i32) {
    %c0_i32 = arith.constant 0 : i32
    %c0_i32_0 = arith.constant 0 : i32
    return %arg0, %arg1, %c0_i32 : i32, i32, i32
  }
  func.func @transform_1(%arg0: i32, %arg1: i32) -> (i32, i32, i32) {
    %c0_i32 = arith.constant 0 : i32
    %c0_i32_0 = arith.constant 0 : i32
    %c0_i32_1 = arith.constant 0 : i32
    %c0_i32_2 = arith.constant 0 : i32
    return %c0_i32, %c0_i32_0, %c0_i32_1 : i32, i32, i32
  }
  func.func @transform_2(%arg0: i32, %arg1: i32) -> (i32, i32, i32) {
    %c0_i32 = arith.constant 0 : i32
    %c0_i32_0 = arith.constant 0 : i32
    return %arg0, %arg1, %c0_i32 : i32, i32, i32
  }
}

</mosaic_0001>

<llo_original>
// kernel: tpu_custom_call.1
$region0: #{tpu_custom_call.1}
  #allocation0 [shape = 'u32[]', space=smem, size = 0x4, offset = 0x4, fixed_abs, tag = 'smem constant byte address 0x4 - core index']
  #allocation1 [shape = 'u32[144,128]{1,0:T(1,128)}', space=vmem, size = 0x12000, scoped, tag = 'internal scratch']
  %s0 = inlined_call_operand.hbm [shape: f32[2,8,32], index: 0, kind: input, shape index: {}]
  %s1 = inlined_call_operand.vmem [shape: f32[1,1,32], index: 1, kind: input, shape index: {}]
  %s2 = inlined_call_operand.hbm [shape: f32[2,8,32], index: 2, kind: output, shape index: {}]
  %s3 = sld [smem:[#allocation0]]
  $region45: #{tpu_custom_call.1} parent=0
    _
  %s5 = ssub.s32 1, %s3
  %s6 = scalar_select 0, %s5, %s3
  $region1: #{tpu_custom_call.1} parent=0
    #allocation2 [shape = 'u8[8192]{0}', space=vmem, size = 0x2000, scoped, tag = 'input window, operand 0']
    #allocation3 [shape = 's32[2]{0}', space=sflag, size = 0x8, scoped, tag = 'scoped memory for tpu_custom_call.1']
    #allocation4 [shape = 's32[2]{0}', space=sflag, size = 0x8, scoped, tag = 'scoped memory for tpu_custom_call.1']
    #allocation5 [shape = 'u8[8192]{0}', space=vmem, size = 0x2000, scoped, tag = 'output window, operand 0']
    %7 = vsyncpa [#allocation3], 0
    %s8 = scalar_lea.sflag [#allocation3], 1
    %9 = vsyncpa %s8, 0
    %10 = vsyncpa [#allocation4], 0
    %s11 = scalar_lea.sflag [#allocation4], 1
    %12 = vsyncpa %s11, 0
    loop: start=0, step=1, limit=4
    $region2: #{tpu_custom_call.1} parent=1 // loop_pre_header
      _
    $region3: #{tpu_custom_call.1} parent=1 // loop_header
      %s14 = sphi 0, %s18
      %p15 = scmp.ge.s32.totalorder %s14, 4
      %s21 = sphi 0, %s33
      %s22 = sphi 0, %s29
      %s23 = sphi 0, %s21
      %s24 = sphi 0, %s22
      %s25 = sphi 0, %s23
      %s26 = sphi 0, %s24
      %s38 = sphi 0, %s40
      %s41 = sphi 0, %s38
      %s42 = sphi 0, %s41
      %s58 = sphi 0, %s42
      %s62 = sphi 0, %s62
      %s64 = sphi 0, %s62
      %s65 = sphi 0, %s64
      %s79 = sphi 0, %s65
      %s87 = sphi 0, %s89
      %s90 = sphi 0, %s87
      %s91 = sphi 0, %s90
      %s107 = sphi 0, %s91
    $region4: #{tpu_custom_call.1} parent=1 // loop_header_branch
      %17 = sbr.rel (%p15) target = $region8
    $region5: #{tpu_custom_call.1} parent=1 // loop_body
      %s19 = ssub.s32 %s14, 1
      %s20 = ssub.s32 %s14, 2
      %s27 = sadd.s32 1, %s22
      %p28 = scmp.ge.s32.totalorder %s27, 1
      %s29 = scalar_select %p28, 0, %s27
      %s30 = sadd.s32 1, %s21
      %s31 = scalar_select %p28, %s30, %s21
      %p32 = scmp.ge.s32.totalorder %s31, 2
      %s33 = scalar_select %p32, 0, %s31
      %s34 = ssub.s32 %s21, %s33
      %s35 = ssub.s32 %s22, %s29
      %s36 = sor.u32 %s34, %s35
      %p37 = scmp.eq.s32.totalorder %s36, 0
      %s39 = sadd.s32 %s38, 1
      %s40 = scalar_select %p37, %s38, %s39
      %p43 = pneg %p37
      %p44 = scmp.eq.s32.totalorder %s14, 1
      %p45 = por %p43, %p44
      %p46 = scmp.ne.s32.totalorder %s38, %s41
      %p47 = scmp.eq.s32.totalorder %s14, 0
      %p48 = por %p46, %p47
      %p49 = scmp.ne.s32.totalorder %s38, %s41
      %p50 = scmp.eq.s32.totalorder %s19, 1
      %p51 = por %p49, %p50
      %p52 = scmp.ne.s32.totalorder %s41, %s42
      %p53 = scmp.eq.s32.totalorder %s19, 0
      %p54 = por %p52, %p53
      %p55 = scmp.ne.s32.totalorder %s41, %s42
      %p56 = scmp.eq.s32.totalorder %s20, 1
      %p57 = por %p55, %p56
      %p59 = scmp.ne.s32.totalorder %s42, %s58
      %p60 = scmp.eq.s32.totalorder %s20, 0
      %p61 = por %p59, %p60
      %s63 = sadd.s32 %s62, 1
      %p66 = scmp.eq.s32.totalorder %s14, 1
      %p67 = scmp.ne.s32.totalorder %s62, %s64
      %p68 = scmp.eq.s32.totalorder %s14, 0
      %p69 = por %p67, %p68
      %p70 = scmp.ne.s32.totalorder %s62, %s64
      %p71 = scmp.eq.s32.totalorder %s19, 1
      %p72 = por %p70, %p71
      %p73 = scmp.ne.s32.totalorder %s64, %s65
      %p74 = scmp.eq.s32.totalorder %s19, 0
      %p75 = por %p73, %p74
      %p76 = scmp.ne.s32.totalorder %s64, %s65
      %p77 = scmp.eq.s32.totalorder %s20, 1
      %p78 = por %p76, %p77
      %p80 = scmp.ne.s32.totalorder %s65, %s79
      %p81 = scmp.eq.s32.totalorder %s20, 0
      %p82 = por %p80, %p81
      %s83 = ssub.s32 %s21, %s33
      %s84 = ssub.s32 %s22, %s29
      %s85 = sor.u32 %s83, %s84
      %p86 = scmp.eq.s32.totalorder %s85, 0
      %s88 = sadd.s32 %s87, 1
      %s89 = scalar_select %p86, %s87, %s88
      %p92 = pneg %p86
      %p93 = scmp.eq.s32.totalorder %s14, 1
      %p94 = por %p92, %p93
      %p95 = scmp.ne.s32.totalorder %s87, %s90
      %p96 = scmp.eq.s32.totalorder %s14, 0
      %p97 = por %p95, %p96
      %p98 = scmp.ne.s32.totalorder %s87, %s90
      %p99 = scmp.eq.s32.totalorder %s19, 1
      %p100 = por %p98, %p99
      %p101 = scmp.ne.s32.totalorder %s90, %s91
      %p102 = scmp.eq.s32.totalorder %s19, 0
      %p103 = por %p101, %p102
      %p104 = scmp.ne.s32.totalorder %s90, %s91
      %p105 = scmp.eq.s32.totalorder %s20, 1
      %p106 = por %p104, %p105
      %p108 = scmp.ne.s32.totalorder %s91, %s107
      %p109 = scmp.eq.s32.totalorder %s20, 0
      %p110 = por %p108, %p109
      %p111 = scmp.le.s32.totalorder 1, %s14
      %p112 = scmp.lt.s32.totalorder %s14, 3
      %p113 = pnand %p111, %p112
      %p114 = pneg %p113
      // Predicated region
      $region9: #{tpu_custom_call.1} parent=5 // pred_check
        _
      $region10: #{tpu_custom_call.1} parent=5 // pred_check_branch
        %116 = sbr.rel (%p113) target = $region12
      $region11: #{tpu_custom_call.1} parent=5 // pred_region
        %s117 = ssub.s32 %s14, 1
        // Predicated region
        $region13: #{tpu_custom_call.1} parent=11 // pred_check
          %p118 = pneg %p75
        $region14: #{tpu_custom_call.1} parent=11 // pred_check_branch
          %120 = sbr.rel (%p118) target = $region16
        $region15: #{tpu_custom_call.1} parent=11 // pred_region
          _
        $region16: #{tpu_custom_call.1} parent=11 // pred_fallthru
          _
      $region12: #{tpu_custom_call.1} parent=5 // pred_fallthru
        _
      %p121 = scmp.lt.s32.totalorder %s14, 2
      // Predicated region
      $region17: #{tpu_custom_call.1} parent=5 // pred_check
        %p122 = pneg %p121
      $region18: #{tpu_custom_call.1} parent=5 // pred_check_branch
        %124 = sbr.rel (%p122) target = $region20
      $region19: #{tpu_custom_call.1} parent=5 // pred_region
        // Predicated region
        $region21: #{tpu_custom_call.1} parent=19 // pred_check
          %p125 = pneg %p48
        $region22: #{tpu_custom_call.1} parent=19 // pred_check_branch
          %127 = sbr.rel (%p125) target = $region24
        $region23: #{tpu_custom_call.1} parent=19 // pred_region
          %s128 = sand.u32 %s38, 1
          %s129 = scalar_lea.sflag [#allocation3], %s128
          %s130 = sand.u32 %s38, 1
          %s131 = smul.addr %s130, 8
          %s132 = scalar_lea.vmem [#allocation2], %s131
          %s134 = ssub.s32 128, 128
          %135 = vsyncadd %s129, %s134
          %s136 = sadd.s32 %s22, %s21
          %s137 = smul.addr %s136, 128
          %s138 = scalar_lea.hbm %s0, %s137
          %s140 = sshll.u32 %s132, 4
          %s141 = int_to_ptr.vmem [resolvable:$true] %s140
          %143 = dma.hbm_to_vmem [thread:$0]  %s138, 128, %s141, %s129
        $region24: #{tpu_custom_call.1} parent=19 // pred_fallthru
          _
      $region20: #{tpu_custom_call.1} parent=5 // pred_fallthru
        _
      %p144 = scmp.le.s32.totalorder 1, %s14
      %p145 = scmp.lt.s32.totalorder %s14, 3
      %p146 = pnand %p144, %p145
      %p147 = pneg %p146
      // Predicated region
      $region25: #{tpu_custom_call.1} parent=5 // pred_check
        _
      $region26: #{tpu_custom_call.1} parent=5 // pred_check_branch
        %149 = sbr.rel (%p146) target = $region28
      $region27: #{tpu_custom_call.1} parent=5 // pred_region
        %s150 = ssub.s32 %s14, 1
        %s151 = sand.u32 %s41, 1
        %s152 = scalar_lea.sflag [#allocation3], %s151
        %s153 = sand.u32 %s41, 1
        %s154 = smul.addr %s153, 8
        %s155 = scalar_lea.vmem [#allocation2], %s154
        // Predicated region
        $region29: #{tpu_custom_call.1} parent=27 // pred_check
          %p156 = pneg %p54
        $region30: #{tpu_custom_call.1} parent=27 // pred_check_branch
          %158 = sbr.rel (%p156) target = $region32
        $region31: #{tpu_custom_call.1} parent=27 // pred_region
          %159 = dma.done %s152, 128
        $region32: #{tpu_custom_call.1} parent=27 // pred_fallthru
          _
        %s160 = sand.u32 %s41, 1
        %s161 = scalar_lea.sflag [#allocation3], %s160
        %s162 = sand.u32 %s41, 1
        %s163 = smul.addr %s162, 8
        %s164 = scalar_lea.vmem [#allocation2], %s163
        %p165 = pneg %p54
        %p166 = pneg %p51
        %p167 = pneg %p75
        %p168 = pneg %p72
        %p169 = pneg %p103
        %p170 = pneg %p100
        %s171 = sand.u32 %s90, 1
        %s172 = scalar_lea.sflag [#allocation4], %s171
        %s173 = sand.u32 %s90, 1
        %s174 = smul.addr %s173, 8
        %s175 = scalar_lea.vmem [#allocation5], %s174
        %v176 = vld [vmem:[%s155] sm:$0xff]
        %v177 = vld [vmem:[%s1] sm:$0x1]
        %v178 = vmul.f32 %v176, %v176
        %vm179 = vcmask 261120
        %v180 = vsel %vm179, %v178, 0.0
        %181 = vadd.xlane.f32.xlu0 %v180
        %v182 = vpop.xlane.xlu0 %181
        %v183 = vmax.f32 %v182, 1e-24
        %v184 = vrsqrt.pop %v183
        %v185 = vmul.f32 %v184, 5.656854
        %v186 = vmul.f32 %v176, %v185
        %v188 = vlaneseq
        %v189 = vshrl.u32 %v188, 7
        %v190 = vsub.s32 0, %v189
        %v191 = vrot.slane %v177, %v190
        %v193 = vmul.f32 %v186, %v191
        %194 = vst.msk [vmem:[%s175] sm:$0xff] %vm179, %v193
        %s195 = sand.u32 %s90, 1
        %s196 = scalar_lea.sflag [#allocation4], %s195
        %s197 = sand.u32 %s90, 1
        %s198 = smul.addr %s197, 8
        %s199 = scalar_lea.vmem [#allocation5], %s198
        // Predicated region
        $region33: #{tpu_custom_call.1} parent=27 // pred_check
          %p200 = pneg %p100
        $region34: #{tpu_custom_call.1} parent=27 // pred_check_branch
          %202 = sbr.rel (%p200) target = $region36
        $region35: #{tpu_custom_call.1} parent=27 // pred_region
          %s204 = ssub.s32 128, 128
          %205 = vsyncadd %s196, %s204
          %s206 = sadd.s32 %s24, %s23
          %s207 = smul.addr %s206, 128
          %s208 = scalar_lea.hbm %s2, %s207
          %s210 = sshll.u32 %s199, 4
          %s211 = int_to_ptr.vmem [resolvable:$true] %s210
          %213 = dma.vmem_to_hbm [thread:$0]  %s211, 128, %s208, %s196
        $region36: #{tpu_custom_call.1} parent=27 // pred_fallthru
          _
      $region28: #{tpu_custom_call.1} parent=5 // pred_fallthru
        _
      %p214 = scmp.le.s32.totalorder 2, %s14
      // Predicated region
      $region37: #{tpu_custom_call.1} parent=5 // pred_check
        %p215 = pneg %p214
      $region38: #{tpu_custom_call.1} parent=5 // pred_check_branch
        %217 = sbr.rel (%p215) target = $region40
      $region39: #{tpu_custom_call.1} parent=5 // pred_region
        %s218 = ssub.s32 %s14, 2
        // Predicated region
        $region41: #{tpu_custom_call.1} parent=39 // pred_check
          %p219 = pneg %p106
        $region42: #{tpu_custom_call.1} parent=39 // pred_check_branch
          %221 = sbr.rel (%p219) target = $region44
        $region43: #{tpu_custom_call.1} parent=39 // pred_region
          %s222 = sand.u32 %s91, 1
          %s223 = scalar_lea.sflag [#allocation4], %s222
          %s224 = sand.u32 %s91, 1
          %s225 = smul.addr %s224, 8
          %s226 = scalar_lea.vmem [#allocation5], %s225
          %227 = dma.done %s223, 128
        $region44: #{tpu_custom_call.1} parent=39 // pred_fallthru
          _
      $region40: #{tpu_custom_call.1} parent=5 // pred_fallthru
        _
    $region6: #{tpu_custom_call.1} parent=1 // loop_footer
      %s18 = sadd.s32 1, %s14
    $region7: #{tpu_custom_call.1} parent=1 // loop_footer_branch
      %13 = sbr.rel target = $region3
    $region8: #{tpu_custom_call.1} parent=1 // loop_exit
      _
    %228 = vsyncpa [#allocation3], 1
    %s229 = scalar_lea.sflag [#allocation3], 1
    %230 = vsyncpa %s229, 1
    %231 = vsyncpa [#allocation4], 1
    %s232 = scalar_lea.sflag [#allocation4], 1
    %233 = vsyncpa %s232, 1

</llo_original>
